<compile_context>
chip_gen: v5e
topology: v5e:2x2
jax: 0.10.0
libtpu: 0.0.40
codegen_flags: <defaults>
</compile_context>

<pallas_src>
import functools

import jax
import jax.numpy as jnp
from jax.experimental import pallas as pl
from jax.experimental.pallas import tpu as pltpu

_LANE = 128


def _hardtanh_kernel(x_ref, o_ref, *, min_val, max_val):
    x = x_ref[...]
    # Bounds cast to the input dtype (matches torch.hardtanh on the float path;
    # integer tensors get truncated bounds — unchanged from previous revision).
    lo = jnp.asarray(min_val, dtype=x.dtype)
    hi = jnp.asarray(max_val, dtype=x.dtype)
    o_ref[...] = jnp.clip(x, lo, hi)


def _tpu_config():
    """Generation-aware block / VMEM sizing (trace-time query, safe fallback)."""
    vmem_cap = 128 * 1024 * 1024
    try:
        info = pltpu.get_tpu_info()
        vmem_cap = int(getattr(info, "vmem_capacity_bytes", vmem_cap))
    except Exception:
        pass
    if vmem_cap <= 64 * 1024 * 1024:
        # v7x-class: 64 MiB physical VMEM, ~3.2 TB/s HBM, 2 TensorCores/chip.
        return {"block_bytes": 8 << 20, "vmem_limit": 48 << 20, "num_cores": 2}
    # v5e / v6e: 128 MiB physical VMEM, 0.8-1.4 TB/s HBM, 1 TensorCore.
    return {"block_bytes": 8 << 20, "vmem_limit": 64 << 20, "num_cores": 1}


def _hardtanh_aligned(x_flat, min_val, max_val, cfg):
    """Tiled, pipelined clamp over a flat array whose size is a multiple of 128."""
    n = x_flat.shape[0]
    dtype = x_flat.dtype
    itemsize = jnp.dtype(dtype).itemsize

    # Widest lane width that divides n: the 2D reshape is then a pure bitcast
    # (no extra HBM copies) and the output stores are lane-dense.
    lane = _LANE
    for cand in (1024, 512, 256, _LANE):
        if n % cand == 0:
            lane = cand
            break
    rows = n // lane
    x2d = x_flat.reshape(rows, lane)

    # Minimum sublane granularity for this dtype (8 for 4B, 16 for 2B, 32 for 1B).
    sub = max(8, 32 // itemsize)

    # Block sized for ~cfg["block_bytes"] to amortize the ~0.35us/step overhead.
    block_rows = max(sub, cfg["block_bytes"] // (lane * itemsize))
    block_rows = (block_rows // sub) * sub

    # For anything bigger than ~1 MiB keep >= 4 grid steps so the next input
    # DMA and previous output writeback overlap with compute (grid=(1,) would
    # serialize DMA-in -> compute -> DMA-out and idle v7x's second core).
    if n * itemsize > (1 << 20):
        cap = (max(sub, rows // 4) // sub) * sub
        if cap >= sub:
            block_rows = min(block_rows, cap)
    block_rows = min(block_rows, rows)

    steps = pl.cdiv(rows, block_rows)

    # v7x: balance the two TensorCores by nudging the step count to a multiple
    # of the core count when the row granularity allows it.
    nc = cfg["num_cores"]
    if nc > 1 and steps > 1 and steps % nc != 0:
        tgt = ((steps + nc - 1) // nc) * nc
        cand_rows = ((pl.cdiv(rows, tgt) + sub - 1) // sub) * sub
        if sub <= cand_rows <= block_rows:
            block_rows = cand_rows
            steps = pl.cdiv(rows, block_rows)

    out2d = pl.pallas_call(
        functools.partial(_hardtanh_kernel, min_val=min_val, max_val=max_val),
        out_shape=jax.ShapeDtypeStruct((rows, lane), dtype),
        grid_spec=pltpu.PrefetchScalarGridSpec(
            num_scalar_prefetch=0,
            grid=(steps,),
            in_specs=[pl.BlockSpec((block_rows, lane), lambda i: (i, 0))],
            out_specs=pl.BlockSpec((block_rows, lane), lambda i: (i, 0)),
        ),
        compiler_params=pltpu.CompilerParams(
            dimension_semantics=("parallel",),
            vmem_limit_bytes=cfg["vmem_limit"],
        ),
        cost_estimate=pl.CostEstimate(
            flops=2 * n,
            transcendentals=0,
            bytes_accessed=2 * n * itemsize,
        ),
    )(x2d)
    return out2d.reshape(-1)


def _hardtanh_tiny(x_flat, min_val, max_val, cfg):
    """< 128 elements: single full-extent block (block_shape == array shape)."""
    n = x_flat.shape[0]
    out2d = pl.pallas_call(
        functools.partial(_hardtanh_kernel, min_val=min_val, max_val=max_val),
        out_shape=jax.ShapeDtypeStruct((1, n), x_flat.dtype),
        compiler_params=pltpu.CompilerParams(
            vmem_limit_bytes=cfg["vmem_limit"],
        ),
    )(x_flat.reshape(1, n))
    return out2d.reshape(-1)


def hardtanh(x, min_val, max_val):
    """Elementwise hardtanh. Accepts any shape/dtype; NCHW in the demo."""
    orig_shape = x.shape
    n = int(x.size)
    if n == 0:
        return x
    cfg = _tpu_config()
    x_flat = jnp.ravel(x)

    if n % _LANE == 0:
        out_flat = _hardtanh_aligned(x_flat, min_val, max_val, cfg)
    else:
        n_main = (n // _LANE) * _LANE
        if n_main == 0:
            out_flat = _hardtanh_tiny(x_flat, min_val, max_val, cfg)
        else:
            # Aligned prefix through the tiled kernel; the < 128 element tail
            # is clamped in plain JAX (negligible traffic, no pad/slice pass).
            main = _hardtanh_aligned(x_flat[:n_main], min_val, max_val, cfg)
            lo = jnp.asarray(min_val, dtype=x.dtype)
            hi = jnp.asarray(max_val, dtype=x.dtype)
            tail = jnp.clip(x_flat[n_main:], lo, hi)
            out_flat = jnp.concatenate([main, tail])
    return out_flat.reshape(orig_shape)


class HardTanhPallas:
    """Mirror of the PyTorch HardTanh module."""

    def __init__(self, min_val, max_val):
        self.min_val = float(min_val)
        self.max_val = float(max_val)

    def __call__(self, inp):
        return hardtanh(inp, self.min_val, self.max_val)


if __name__ == "__main__":
    key = jax.random.PRNGKey(0)
    # NCHW input, small shape (matches the PyTorch module usage).
    x = jax.random.normal(key, (2, 4, 16, 16), dtype=jnp.float32) * 3.0

    min_val, max_val = -1.0, 1.0
    mod = HardTanhPallas(min_val, max_val)

    out = jax.block_until_ready(mod(x))
    ref = jnp.clip(x, min_val, max_val)
    assert out.shape == x.shape and out.dtype == x.dtype
    assert jnp.allclose(out, ref), "mismatch vs reference (aligned path)"

    # Exercise the unaligned paths too (prefix+tail, and tiny single block).
    for shape in ((3, 701), (5, 21)):
        xi = jax.random.normal(jax.random.PRNGKey(1), shape, dtype=jnp.float32) * 3.0
        oi = jax.block_until_ready(mod(xi))
        assert oi.shape == xi.shape and oi.dtype == xi.dtype
        assert jnp.allclose(oi, jnp.clip(xi, min_val, max_val)), f"mismatch {shape}"

    print("KERNEL_OK")
</pallas_src>

<mosaic_0001>
module attributes {stable_mosaic.version = 11 : i64} {
  func.func @_hardtanh_kernel(%arg0: i32, %arg1: memref<2x1024xf32, #tpu.memory_space<vmem>>, %arg2: memref<2x1024xf32, #tpu.memory_space<vmem>>) attributes {dimension_semantics = [#tpu.dimension_semantics<parallel>], iteration_bounds = array<i64: 1>, scalar_prefetch = 0 : i64, scratch_operands = 0 : i64, tpu.core_type = #tpu.core_type<tc>, window_params = [{transform_indices = @transform_0, window_bounds = array<i64: 2, 1024>}, {transform_indices = @transform_1, window_bounds = array<i64: 2, 1024>}]} {
    %c0 = arith.constant 0 : index
    %c0_0 = arith.constant 0 : index
    %0 = vector.load %arg1[%c0, %c0_0] : memref<2x1024xf32, #tpu.memory_space<vmem>>, vector<2x1024xf32>
    %cst = arith.constant -1.000000e+00 : f32
    %cst_1 = arith.constant 1.000000e+00 : f32
    %1 = vector.broadcast %cst : f32 to vector<2x1024xf32>
    %2 = arith.maximumf %1, %0 : vector<2x1024xf32>
    %3 = vector.broadcast %cst_1 : f32 to vector<2x1024xf32>
    %4 = arith.minimumf %3, %2 : vector<2x1024xf32>
    %c0_2 = arith.constant 0 : index
    %c0_3 = arith.constant 0 : index
    %5 = vector.load %arg2[%c0_2, %c0_3] : memref<2x1024xf32, #tpu.memory_space<vmem>>, vector<2x1024xf32>
    tpu.vector_store %arg2[%c0_2, %c0_3], %4 {strides = array<i32>} : memref<2x1024xf32, #tpu.memory_space<vmem>>, vector<2x1024xf32>,
    return
  }
  func.func @transform_0(%arg0: i32) -> (i32, i32) {
    %c0_i32 = arith.constant 0 : i32
    %c0_i32_0 = arith.constant 0 : i32
    return %arg0, %c0_i32 : i32, i32
  }
  func.func @transform_1(%arg0: i32) -> (i32, i32) {
    %c0_i32 = arith.constant 0 : i32
    %c0_i32_0 = arith.constant 0 : i32
    return %arg0, %c0_i32 : i32, i32
  }
}

</mosaic_0001>

<llo_original>
// kernel: tpu_custom_call.1
$region0: #{tpu_custom_call.1}
  #allocation0 [shape = 'u32[]', space=smem, size = 0x4, offset = 0x4, fixed_abs, tag = 'smem constant byte address 0x4 - core index']
  #allocation1 [shape = 'u32[72,128]{1,0:T(1,128)}', space=vmem, size = 0x9000, scoped, tag = 'internal scratch']
  %s0 = inlined_call_operand.hbm [shape: f32[2,1024], index: 0, kind: input, shape index: {}]
  %s1 = inlined_call_operand.hbm [shape: f32[2,1024], index: 1, kind: output, shape index: {}]
  %s2 = sld [smem:[#allocation0]]
  $region18: #{tpu_custom_call.1} parent=0
    _
  %s4 = ssub.s32 1, %s2
  %s5 = scalar_select 0, %s4, %s2
  $region1: #{tpu_custom_call.1} parent=0
    #allocation2 [shape = 'u8[8192]{0}', space=vmem, size = 0x2000, scoped, tag = 'input window, operand 0, single buffered']
    #allocation3 [shape = 's32[1]{0}', space=sflag, size = 0x4, scoped, tag = 'scoped memory for tpu_custom_call.1']
    #allocation4 [shape = 's32[1]{0}', space=sflag, size = 0x4, scoped, tag = 'scoped memory for tpu_custom_call.1']
    #allocation5 [shape = 'u8[8192]{0}', space=vmem, size = 0x2000, scoped, tag = 'output window, operand 0, single buffered']
    %6 = vsyncpa [#allocation3], 0
    %7 = vsyncpa [#allocation4], 0
    // Predicated region
    $region2: #{tpu_custom_call.1} parent=1 // pred_check
      _
    $region3: #{tpu_custom_call.1} parent=1 // pred_check_branch
      %9 = sbr.rel (0) target = $region5
    $region4: #{tpu_custom_call.1} parent=1 // pred_region
      %11 = vsyncadd [#allocation3], 0
      %s13 = sshll.u32 %s0, 4
      %s14 = int_to_ptr.hbm [resolvable:$true] %s13
      %s15 = sshll.u32 [#allocation2], 4
      %s16 = int_to_ptr.vmem [resolvable:$true] %s15
      %18 = dma.hbm_to_vmem [thread:$0]  %s14, 256, %s16, [#allocation3]
    $region5: #{tpu_custom_call.1} parent=1 // pred_fallthru
      _
    // Predicated region
    $region6: #{tpu_custom_call.1} parent=1 // pred_check
      _
    $region7: #{tpu_custom_call.1} parent=1 // pred_check_branch
      %20 = sbr.rel (0) target = $region9
    $region8: #{tpu_custom_call.1} parent=1 // pred_region
      %22 = dma.done [#allocation3], 256
    $region9: #{tpu_custom_call.1} parent=1 // pred_fallthru
      _
    %v23 = vld [vmem:[#allocation2] sm:$0xff]
    %v24 = vld [vmem:[#allocation2 + $0x8] sm:$0xff]
    %v25 = vmax.f32 %v23, -1.0
    %v26 = vmax.f32 %v24, -1.0
    %v27 = vmin.f32 %v25, 1.0
    %v28 = vmin.f32 %v26, 1.0
    %29 = vst [vmem:[#allocation5] sm:$0xff] %v27
    %30 = vst [vmem:[#allocation5 + $0x8] sm:$0xff] %v28
    // Predicated region
    $region10: #{tpu_custom_call.1} parent=1 // pred_check
      _
    $region11: #{tpu_custom_call.1} parent=1 // pred_check_branch
      %32 = sbr.rel (0) target = $region13
    $region12: #{tpu_custom_call.1} parent=1 // pred_region
      %34 = vsyncadd [#allocation4], 0
      %s36 = sshll.u32 [#allocation5], 4
      %s37 = int_to_ptr.vmem [resolvable:$true] %s36
      %s38 = sshll.u32 %s1, 4
      %s39 = int_to_ptr.hbm [resolvable:$true] %s38
      %41 = dma.vmem_to_hbm [thread:$0]  %s37, 256, %s39, [#allocation4]
    $region13: #{tpu_custom_call.1} parent=1 // pred_fallthru
      _
    // Predicated region
    $region14: #{tpu_custom_call.1} parent=1 // pred_check
      _
    $region15: #{tpu_custom_call.1} parent=1 // pred_check_branch
      %43 = sbr.rel (0) target = $region17
    $region16: #{tpu_custom_call.1} parent=1 // pred_region
      %45 = dma.done [#allocation4], 256
    $region17: #{tpu_custom_call.1} parent=1 // pred_fallthru
      _
    %46 = vsyncpa [#allocation3], 1
    %47 = vsyncpa [#allocation4], 1

</llo_original>
